<compile_context>
chip_gen: v7x
topology: tpu7x:2x2x1
jax: 0.10.0
libtpu: 0.0.40
codegen_flags: <defaults>
</compile_context>

<pallas_src>
import functools
import math

import jax
import jax.numpy as jnp
from jax.experimental import pallas as pl
from jax.experimental.pallas import tpu as pltpu


def _device_kind():
    try:
        return jax.devices()[0].device_kind.lower()
    except Exception:
        return ""


def _is_v7_like(kind):
    return ("v7" in kind) or ("7x" in kind)


def _focal_bce_kernel(logit_ref, clip_ref, target_ref, out_ref, acc_ref,
                      *, n_rows, tile_rows, n_inner, has_ragged):
    i = pl.program_id(0)   # core-split axis ("parallel")
    k = pl.program_id(1)   # reduction axis ("arbitrary")

    @pl.when(k == 0)
    def _():
        acc_ref[...] = jnp.zeros_like(acc_ref)

    # Upcast inside the kernel (bf16 inputs halve HBM traffic; f32 is a no-op).
    l = logit_ref[...].astype(jnp.float32)
    c = clip_ref[...].astype(jnp.float32)
    t = target_ref[...].astype(jnp.float32)

    # Sanitize NaN/Inf -> 0 with one compare+select per tensor
    # (|x| < inf is False for NaN and +-Inf).
    l = jnp.where(jnp.abs(l) < jnp.inf, l, 0.0)
    c = jnp.where(jnp.abs(c) < jnp.inf, c, 0.0)

    # Stable BCE-with-logits; exp(-|l|) is shared with the sigmoid (one EUP exp).
    e = jnp.exp(-jnp.abs(l))
    bce_logits = jnp.maximum(l, 0.0) - l * t + jnp.log1p(e)
    inv = pl.reciprocal(1.0 + e, approx=False)     # approx=True: v7x EUP saver
    p = jnp.where(l >= 0.0, inv, e * inv)          # == sigmoid(l), no second exp

    # Focal modulation (gamma = 2): select the modulator first, square once.
    m = jnp.where(t >= 0.5, 1.0 - p, p)
    focal = (m * m) * bce_logits

    # nn.BCELoss on clipwise output, with PyTorch's log clamp at -100.
    # (Two logs kept on purpose: single-log fusion needs hard {0,1} targets.)
    log_c = jnp.maximum(jnp.log(c), -100.0)
    log_1mc = jnp.maximum(jnp.log(1.0 - c), -100.0)
    bce_c = -(t * log_c + (1.0 - t) * log_1mc)

    vals = focal + bce_c

    if has_ragged:
        tile_idx = i * n_inner + k
        row0 = tile_idx * tile_rows
        is_full = row0 + tile_rows <= n_rows

        @pl.when(is_full)
        def _():
            acc_ref[...] += jnp.sum(vals, axis=0, keepdims=True)

        @pl.when(jnp.logical_not(is_full))
        def _():
            # Only the ragged (or fully out-of-range, when clamped) tile pays
            # for a row mask; stale rows may be garbage but are selected away.
            ridx = jax.lax.broadcasted_iota(jnp.int32, vals.shape, 0)
            masked = jnp.where(ridx < (n_rows - row0), vals, 0.0)
            acc_ref[...] += jnp.sum(masked, axis=0, keepdims=True)
    else:
        acc_ref[...] += jnp.sum(vals, axis=0, keepdims=True)

    @pl.when(k == n_inner - 1)
    def _():
        out_ref[0] = acc_ref[...]   # per-split (1, cols) partial-sum vector


def panns_focal_loss(logit, clipwise_output, target, *, tile_budget_bytes=None):
    """Pallas implementation of PANNsWithFocalLoss.forward. Returns a scalar."""
    assert logit.shape == clipwise_output.shape == target.shape
    shape = logit.shape
    if len(shape) == 0:
        logit = logit.reshape(1, 1)
        clipwise_output = clipwise_output.reshape(1, 1)
        target = target.reshape(1, 1)
        shape = (1, 1)

    cols = shape[-1]
    rows = math.prod(shape[:-1]) if len(shape) > 1 else 1
    n_valid = rows * cols

    # Free layout change for contiguous inputs: collapse leading dims, keep the
    # trailing dim intact (lane-dense, no jnp.pad / no extra HBM pass).
    l2 = logit.reshape(rows, cols)
    c2 = clipwise_output.reshape(rows, cols)
    t2 = target.reshape(rows, cols)

    kind = _device_kind()
    v7_like = _is_v7_like(kind)

    if tile_budget_bytes is None:
        # Per-input f32 tile budget: 2 MiB on v7-like parts (12 MiB live with
        # 3 inputs double-buffered, inside the 32 MiB scoped default), 1 MiB on
        # v5e/v6e (6 MiB live, inside v5e's 16 MiB default).
        tile_budget_bytes = (2 << 20) if v7_like else (1 << 20)

    bytes_per_row = cols * 4
    if rows * bytes_per_row <= tile_budget_bytes:
        tile_rows = rows                      # single full-array block
    else:
        tile_rows = max(8, (tile_budget_bytes // bytes_per_row) // 8 * 8)

    n_tiles = -(-rows // tile_rows)

    # 2-way TensorCore split only on v7-like parts (and only when worthwhile);
    # single-TC v5e/v6e get a trivial size-1 leading axis (no padded tiles).
    num_splits = 2 if (v7_like and n_tiles >= 4) else 1
    n_tiles_padded = -(-n_tiles // num_splits) * num_splits
    n_inner = n_tiles_padded // num_splits
    has_ragged = (rows % tile_rows != 0) or (n_tiles_padded != n_tiles)

    if n_tiles_padded == n_tiles:
        in_map = lambda i, k: (i * n_inner + k, 0)
    else:
        # Clamp so no block is fully out of range; the kernel's row mask zeroes
        # the (re-read) contribution of clamped tiles.
        last_block = n_tiles - 1
        in_map = lambda i, k: (jnp.minimum(i * n_inner + k, last_block), 0)

    in_spec = pl.BlockSpec((tile_rows, cols), in_map)
    out_spec = pl.BlockSpec((1, 1, cols), lambda i, k: (i, 0, 0))

    kernel = functools.partial(
        _focal_bce_kernel,
        n_rows=rows, tile_rows=tile_rows, n_inner=n_inner,
        has_ragged=has_ragged)

    partials = pl.pallas_call(
        kernel,
        out_shape=jax.ShapeDtypeStruct((num_splits, 1, cols), jnp.float32),
        grid=(num_splits, n_inner),
        in_specs=[in_spec, in_spec, in_spec],
        out_specs=out_spec,
        scratch_shapes=[pltpu.VMEM((1, cols), jnp.float32)],
        compiler_params=pltpu.CompilerParams(
            dimension_semantics=("parallel", "arbitrary")),
    )(l2, c2, t2)

    # Tiny epilogue: single cross-lane reduce of the per-split partial vectors,
    # then (mean(focal) + mean(bce)) / 2 using the TRUE element count.
    return jnp.sum(partials) * (0.5 / n_valid)


def _reference(logit, clipwise_output, target):
    """Pure-JAX reference mirroring the PyTorch forward exactly."""
    l = jnp.where(jnp.isnan(logit), 0.0, logit)
    l = jnp.where(jnp.isinf(l), 0.0, l)
    c = jnp.where(jnp.isnan(clipwise_output), 0.0, clipwise_output)
    c = jnp.where(jnp.isinf(c), 0.0, c)
    t = target.astype(jnp.float32)
    bce_l = jnp.maximum(l, 0.0) - l * t + jnp.log1p(jnp.exp(-jnp.abs(l)))
    p = jax.nn.sigmoid(l)
    focal = jnp.where(t >= 0.5, (1.0 - p) ** 2 * bce_l, p ** 2 * bce_l)
    log_c = jnp.maximum(jnp.log(c), -100.0)
    log_1mc = jnp.maximum(jnp.log(1.0 - c), -100.0)
    bce_c = -(t * log_c + (1.0 - t) * log_1mc)
    return (jnp.mean(focal) + jnp.mean(bce_c)) / 2.0


if __name__ == "__main__":
    key = jax.random.PRNGKey(0)
    k1, k2, k3 = jax.random.split(key, 3)

    B, C = 8, 527  # (batch, num_classes) — PANNs-style class count
    logit = jax.random.normal(k1, (B, C), dtype=jnp.float32) * 2.0
    clipwise = jax.nn.sigmoid(jax.random.normal(k2, (B, C), dtype=jnp.float32))
    target = (jax.random.uniform(k3, (B, C)) > 0.5).astype(jnp.float32)

    # Exercise the NaN/Inf sanitization path.
    logit = logit.at[0, 0].set(jnp.inf)
    logit = logit.at[1, 1].set(jnp.nan)
    clipwise = clipwise.at[2, 3].set(jnp.nan)

    loss_fn = jax.jit(panns_focal_loss)
    loss = loss_fn(logit, clipwise, target)
    jax.block_until_ready(loss)
    ref = _reference(logit, clipwise, target)
    assert jnp.allclose(loss, ref, rtol=1e-5, atol=1e-5), (loss, ref)

    # Exercise the multi-tile + ragged-tail path with a forced small tile budget.
    B2 = 64
    l_big = jax.random.normal(jax.random.PRNGKey(1), (B2, C), dtype=jnp.float32) * 3.0
    c_big = jax.nn.sigmoid(jax.random.normal(jax.random.PRNGKey(2), (B2, C),
                                             dtype=jnp.float32))
    t_big = (jax.random.uniform(jax.random.PRNGKey(3), (B2, C)) > 0.5).astype(jnp.float32)
    tiled_fn = jax.jit(functools.partial(panns_focal_loss,
                                         tile_budget_bytes=64 * 1024))
    loss2 = tiled_fn(l_big, c_big, t_big)
    jax.block_until_ready(loss2)
    ref2 = _reference(l_big, c_big, t_big)
    assert jnp.allclose(loss2, ref2, rtol=1e-5, atol=1e-5), (loss2, ref2)

    print("KERNEL_OK")
</pallas_src>

<mosaic_0001>
module attributes {stable_mosaic.version = 11 : i64} {
  func.func @_focal_bce_kernel(%arg0: i32, %arg1: i32, %arg2: memref<8x527xf32, #tpu.memory_space<vmem>>, %arg3: memref<8x527xf32, #tpu.memory_space<vmem>>, %arg4: memref<8x527xf32, #tpu.memory_space<vmem>>, %arg5: memref<1x1x527xf32, #tpu.memory_space<vmem>>, %arg6: memref<1x527xf32, #tpu.memory_space<vmem>>) attributes {dimension_semantics = [#tpu.dimension_semantics<parallel>, #tpu.dimension_semantics<arbitrary>], iteration_bounds = array<i64: 1, 1>, scalar_prefetch = 0 : i64, scratch_operands = 1 : i64, tpu.core_type = #tpu.core_type<tc>, window_params = [{transform_indices = @transform_0, window_bounds = array<i64: 8, 527>}, {transform_indices = @transform_1, window_bounds = array<i64: 8, 527>}, {transform_indices = @transform_2, window_bounds = array<i64: 8, 527>}, {transform_indices = @transform_3, window_bounds = array<i64: 1, 1, 527>}]} {
    %c0_i32 = arith.constant 0 : i32
    %0 = arith.cmpi eq, %arg1, %c0_i32 : i32
    %1 = arith.extui %0 : i1 to i32
    %c0_i32_0 = arith.constant 0 : i32
    %2 = arith.cmpi ne, %1, %c0_i32_0 : i32
    scf.if %2 {
      %cst_27 = arith.constant 0.000000e+00 : f32
      %64 = vector.broadcast %cst_27 : f32 to vector<1x527xf32>
      %c0_28 = arith.constant 0 : index
      %c0_29 = arith.constant 0 : index
      %65 = vector.load %arg6[%c0_28, %c0_29] : memref<1x527xf32, #tpu.memory_space<vmem>>, vector<1x527xf32>
      tpu.vector_store %arg6[%c0_28, %c0_29], %64 {strides = array<i32>} : memref<1x527xf32, #tpu.memory_space<vmem>>, vector<1x527xf32>,
    } else {
    }
    %c0 = arith.constant 0 : index
    %c0_1 = arith.constant 0 : index
    %3 = vector.load %arg2[%c0, %c0_1] : memref<8x527xf32, #tpu.memory_space<vmem>>, vector<8x527xf32>
    %c0_2 = arith.constant 0 : index
    %c0_3 = arith.constant 0 : index
    %4 = vector.load %arg3[%c0_2, %c0_3] : memref<8x527xf32, #tpu.memory_space<vmem>>, vector<8x527xf32>
    %c0_4 = arith.constant 0 : index
    %c0_5 = arith.constant 0 : index
    %5 = vector.load %arg4[%c0_4, %c0_5] : memref<8x527xf32, #tpu.memory_space<vmem>>, vector<8x527xf32>
    %6 = math.absf %3 : vector<8x527xf32>
    %cst = arith.constant 0x7F800000 : f32
    %7 = vector.broadcast %cst : f32 to vector<8x527xf32>
    %8 = arith.cmpf olt, %6, %7 : vector<8x527xf32>
    %cst_6 = arith.constant 0.000000e+00 : f32
    %9 = vector.broadcast %cst_6 : f32 to vector<8x527xf32>
    %10 = arith.select %8, %3, %9 : vector<8x527xi1>, vector<8x527xf32>
    %11 = math.absf %4 : vector<8x527xf32>
    %cst_7 = arith.constant 0x7F800000 : f32
    %12 = vector.broadcast %cst_7 : f32 to vector<8x527xf32>
    %13 = arith.cmpf olt, %11, %12 : vector<8x527xf32>
    %cst_8 = arith.constant 0.000000e+00 : f32
    %14 = vector.broadcast %cst_8 : f32 to vector<8x527xf32>
    %15 = arith.select %13, %4, %14 : vector<8x527xi1>, vector<8x527xf32>
    %16 = math.absf %10 : vector<8x527xf32>
    %cst_9 = arith.constant 0.000000e+00 : f32
    %17 = vector.broadcast %cst_9 : f32 to vector<8x527xf32>
    %18 = arith.subf %17, %16 : vector<8x527xf32>
    %19 = math.exp %18 : vector<8x527xf32>
    %cst_10 = arith.constant 0.000000e+00 : f32
    %20 = vector.broadcast %cst_10 : f32 to vector<8x527xf32>
    %21 = arith.maximumf %10, %20 : vector<8x527xf32>
    %22 = arith.mulf %10, %5 : vector<8x527xf32>
    %23 = arith.subf %21, %22 : vector<8x527xf32>
    %24 = math.log1p %19 : vector<8x527xf32>
    %25 = arith.addf %23, %24 : vector<8x527xf32>
    %cst_11 = arith.constant 1.000000e+00 : f32
    %26 = vector.broadcast %cst_11 : f32 to vector<8x527xf32>
    %27 = arith.addf %26, %19 : vector<8x527xf32>
    %28 = tpu.reciprocal %27 : vector<8x527xf32> -> vector<8x527xf32>
    %cst_12 = arith.constant 0.000000e+00 : f32
    %29 = vector.broadcast %cst_12 : f32 to vector<8x527xf32>
    %30 = arith.cmpf oge, %10, %29 : vector<8x527xf32>
    %31 = arith.mulf %19, %28 : vector<8x527xf32>
    %32 = arith.select %30, %28, %31 : vector<8x527xi1>, vector<8x527xf32>
    %cst_13 = arith.constant 5.000000e-01 : f32
    %33 = vector.broadcast %cst_13 : f32 to vector<8x527xf32>
    %34 = arith.cmpf oge, %5, %33 : vector<8x527xf32>
    %cst_14 = arith.constant 1.000000e+00 : f32
    %35 = vector.broadcast %cst_14 : f32 to vector<8x527xf32>
    %36 = arith.subf %35, %32 : vector<8x527xf32>
    %37 = arith.select %34, %36, %32 : vector<8x527xi1>, vector<8x527xf32>
    %38 = arith.mulf %37, %37 : vector<8x527xf32>
    %39 = arith.mulf %38, %25 : vector<8x527xf32>
    %40 = math.log %15 : vector<8x527xf32>
    %cst_15 = arith.constant -1.000000e+02 : f32
    %41 = vector.broadcast %cst_15 : f32 to vector<8x527xf32>
    %42 = arith.maximumf %40, %41 : vector<8x527xf32>
    %cst_16 = arith.constant 1.000000e+00 : f32
    %43 = vector.broadcast %cst_16 : f32 to vector<8x527xf32>
    %44 = arith.subf %43, %15 : vector<8x527xf32>
    %45 = math.log %44 : vector<8x527xf32>
    %cst_17 = arith.constant -1.000000e+02 : f32
    %46 = vector.broadcast %cst_17 : f32 to vector<8x527xf32>
    %47 = arith.maximumf %45, %46 : vector<8x527xf32>
    %48 = arith.mulf %5, %42 : vector<8x527xf32>
    %cst_18 = arith.constant 1.000000e+00 : f32
    %49 = vector.broadcast %cst_18 : f32 to vector<8x527xf32>
    %50 = arith.subf %49, %5 : vector<8x527xf32>
    %51 = arith.mulf %50, %47 : vector<8x527xf32>
    %52 = arith.addf %48, %51 : vector<8x527xf32>
    %cst_19 = arith.constant 0.000000e+00 : f32
    %53 = vector.broadcast %cst_19 : f32 to vector<8x527xf32>
    %54 = arith.subf %53, %52 : vector<8x527xf32>
    %55 = arith.addf %39, %54 : vector<8x527xf32>
    %c0_20 = arith.constant 0 : index
    %c0_21 = arith.constant 0 : index
    %56 = vector.load %arg6[%c0_20, %c0_21] : memref<1x527xf32, #tpu.memory_space<vmem>>, vector<1x527xf32>
    %cst_22 = arith.constant dense<0.000000e+00> : vector<527xf32>
    %57 = vector.multi_reduction <add>, %55, %cst_22 [0] : vector<8x527xf32> to vector<527xf32>
    %58 = vector.shape_cast %57 : vector<527xf32> to vector<1x527xf32>
    %59 = arith.addf %56, %58 : vector<1x527xf32>
    %c0_23 = arith.constant 0 : index
    %c0_24 = arith.constant 0 : index
    %60 = vector.load %arg6[%c0_23, %c0_24] : memref<1x527xf32, #tpu.memory_space<vmem>>, vector<1x527xf32>
    tpu.vector_store %arg6[%c0_23, %c0_24], %59 {strides = array<i32>} : memref<1x527xf32, #tpu.memory_space<vmem>>, vector<1x527xf32>,
    %c0_i32_25 = arith.constant 0 : i32
    %61 = arith.cmpi eq, %arg1, %c0_i32_25 : i32
    %62 = arith.extui %61 : i1 to i32
    %c0_i32_26 = arith.constant 0 : i32
    %63 = arith.cmpi ne, %62, %c0_i32_26 : i32
    scf.if %63 {
      %c0_27 = arith.constant 0 : index
      %c0_28 = arith.constant 0 : index
      %64 = vector.load %arg6[%c0_27, %c0_28] : memref<1x527xf32, #tpu.memory_space<vmem>>, vector<1x527xf32>
      %c0_29 = arith.constant 0 : index
      %c0_30 = arith.constant 0 : index
      %c0_31 = arith.constant 0 : index
      %65 = vector.load %arg5[%c0_29, %c0_30, %c0_31] : memref<1x1x527xf32, #tpu.memory_space<vmem>>, vector<1x1x527xf32>
      %66 = vector.shape_cast %65 : vector<1x1x527xf32> to vector<1x527xf32>
      %67 = vector.shape_cast %64 : vector<1x527xf32> to vector<1x1x527xf32>
      tpu.vector_store %arg5[%c0_29, %c0_30, %c0_31], %67 {strides = array<i32>} : memref<1x1x527xf32, #tpu.memory_space<vmem>>, vector<1x1x527xf32>,
    } else {
    }
    return
  }
  func.func @transform_0(%arg0: i32, %arg1: i32) -> (i32, i32) {
    %c1_i32 = arith.constant 1 : i32
    %0 = arith.muli %arg0, %c1_i32 : i32
    %1 = arith.addi %0, %arg1 : i32
    %c0_i32 = arith.constant 0 : i32
    %c0_i32_0 = arith.constant 0 : i32
    return %1, %c0_i32 : i32, i32
  }
  func.func @transform_1(%arg0: i32, %arg1: i32) -> (i32, i32) {
    %c1_i32 = arith.constant 1 : i32
    %0 = arith.muli %arg0, %c1_i32 : i32
    %1 = arith.addi %0, %arg1 : i32
    %c0_i32 = arith.constant 0 : i32
    %c0_i32_0 = arith.constant 0 : i32
    return %1, %c0_i32 : i32, i32
  }
  func.func @transform_2(%arg0: i32, %arg1: i32) -> (i32, i32) {
    %c1_i32 = arith.constant 1 : i32
    %0 = arith.muli %arg0, %c1_i32 : i32
    %1 = arith.addi %0, %arg1 : i32
    %c0_i32 = arith.constant 0 : i32
    %c0_i32_0 = arith.constant 0 : i32
    return %1, %c0_i32 : i32, i32
  }
  func.func @transform_3(%arg0: i32, %arg1: i32) -> (i32, i32, i32) {
    %c0_i32 = arith.constant 0 : i32
    %c0_i32_0 = arith.constant 0 : i32
    %c0_i32_1 = arith.constant 0 : i32
    return %arg0, %c0_i32, %c0_i32_0 : i32, i32, i32
  }
}

</mosaic_0001>

<llo_original>
// kernel: panns_focal_loss.1
$region0: #{panns_focal_loss.1}
  #allocation0 [shape = 'u32[]', space=smem, size = 0x4, offset = 0x4, fixed_abs, tag = 'smem constant byte address 0x4 - core index']
  #allocation1 [shape = 'u32[144,128]{1,0:T(1,128)}', space=vmem, size = 0x12000, scoped, tag = 'internal scratch']
  #allocation2 [shape = 'f32[1,527]{1,0:T(1,128)}', space=vmem, size = 0xa00, scoped, tag = 'scratch operand']
  %s0 = inlined_call_operand.hbm [shape: f32[8,527], index: 0, kind: input, shape index: {}]
  %s1 = inlined_call_operand.hbm [shape: f32[8,527], index: 1, kind: input, shape index: {}]
  %s2 = inlined_call_operand.hbm [shape: f32[8,527], index: 2, kind: input, shape index: {}]
  %s3 = inlined_call_operand.vmem [shape: f32[1,1,527], index: 3, kind: output, shape index: {}]
  %s4 = sld [smem:[#allocation0]]
  $region42: #{panns_focal_loss.1} parent=0
    _
  %s6 = ssub.s32 1, %s4
  %s7 = scalar_select 0, %s6, %s4
  $region1: #{panns_focal_loss.1} parent=0
    #allocation3 [shape = 'u8[20480]{0}', space=vmem, size = 0x5000, scoped, tag = 'input window, operand 0, single buffered']
    #allocation4 [shape = 's32[1]{0}', space=sflag, size = 0x4, scoped, tag = 'scoped memory for panns_focal_loss.1']
    #allocation5 [shape = 'u8[20480]{0}', space=vmem, size = 0x5000, scoped, tag = 'input window, operand 1, single buffered']
    #allocation6 [shape = 's32[1]{0}', space=sflag, size = 0x4, scoped, tag = 'scoped memory for panns_focal_loss.1']
    #allocation7 [shape = 'u8[20480]{0}', space=vmem, size = 0x5000, scoped, tag = 'input window, operand 2, single buffered']
    %8 = vsyncpa [#allocation4], 0
    %9 = vsyncpa [#allocation6], 0
    // Predicated region
    $region2: #{panns_focal_loss.1} parent=1 // pred_check
      _
    $region3: #{panns_focal_loss.1} parent=1 // pred_check_branch
      %11 = sbr.rel (0) target = $region5
    $region4: #{panns_focal_loss.1} parent=1 // pred_region
      %s12 = sadd.s32 0, 0
      %s14 = ssub.s32 640, 640
      %15 = vsyncadd [#allocation4], %s14
      %s16 = smul.addr %s12, 5
      %s17 = smul.addr %s16, 128
      %s18 = scalar_lea.hbm %s0, %s17
      %s20 = sshll.u32 [#allocation3], 4
      %s21 = int_to_ptr.vmem [resolvable:$true] %s20
      %23 = dma.hbm_to_vmem [thread:$0]  %s18, 640, %s21, [#allocation4]
    $region5: #{panns_focal_loss.1} parent=1 // pred_fallthru
      _
    // Predicated region
    $region6: #{panns_focal_loss.1} parent=1 // pred_check
      _
    $region7: #{panns_focal_loss.1} parent=1 // pred_check_branch
      %25 = sbr.rel (0) target = $region9
    $region8: #{panns_focal_loss.1} parent=1 // pred_region
      %s26 = sadd.s32 0, 0
      %s28 = ssub.s32 640, 640
      %29 = vsyncadd [#allocation6], %s28
      %s30 = smul.addr %s26, 5
      %s31 = smul.addr %s30, 128
      %s32 = scalar_lea.hbm %s1, %s31
      %s34 = sshll.u32 [#allocation5], 4
      %s35 = int_to_ptr.vmem [resolvable:$true] %s34
      %37 = dma.hbm_to_vmem [thread:$0]  %s32, 640, %s35, [#allocation6]
    $region9: #{panns_focal_loss.1} parent=1 // pred_fallthru
      _
    // Predicated region
    $region10: #{panns_focal_loss.1} parent=1 // pred_check
      _
    $region11: #{panns_focal_loss.1} parent=1 // pred_check_branch
      %39 = sbr.rel (0) target = $region13
    $region12: #{panns_focal_loss.1} parent=1 // pred_region
      %s40 = sadd.s32 0, 0
      %s42 = ssub.s32 640, 640
      %43 = vsyncadd [#allocation6], %s42
      %s44 = smul.addr %s40, 5
      %s45 = smul.addr %s44, 128
      %s46 = scalar_lea.hbm %s2, %s45
      %s48 = sshll.u32 [#allocation7], 4
      %s49 = int_to_ptr.vmem [resolvable:$true] %s48
      %51 = dma.hbm_to_vmem [thread:$0]  %s46, 640, %s49, [#allocation6]
    $region13: #{panns_focal_loss.1} parent=1 // pred_fallthru
      _
    // Predicated region
    $region14: #{panns_focal_loss.1} parent=1 // pred_check
      _
    $region15: #{panns_focal_loss.1} parent=1 // pred_check_branch
      %53 = sbr.rel (0) target = $region17
    $region16: #{panns_focal_loss.1} parent=1 // pred_region
      %54 = dma.done [#allocation4], 640
    $region17: #{panns_focal_loss.1} parent=1 // pred_fallthru
      _
    // Predicated region
    $region18: #{panns_focal_loss.1} parent=1 // pred_check
      _
    $region19: #{panns_focal_loss.1} parent=1 // pred_check_branch
      %56 = sbr.rel (0) target = $region21
    $region20: #{panns_focal_loss.1} parent=1 // pred_region
      %57 = dma.done [#allocation6], 640
    $region21: #{panns_focal_loss.1} parent=1 // pred_fallthru
      _
    // Predicated region
    $region22: #{panns_focal_loss.1} parent=1 // pred_check
      _
    $region23: #{panns_focal_loss.1} parent=1 // pred_check_branch
      %59 = sbr.rel (0) target = $region25
    $region24: #{panns_focal_loss.1} parent=1 // pred_region
      %60 = dma.done [#allocation6], 640
    $region25: #{panns_focal_loss.1} parent=1 // pred_fallthru
      _
    %s61 = sadd.s32 0, 0
    %s62 = sadd.s32 0, 0
    %s63 = sadd.s32 0, 0
    %p64 = scmp.eq.s32.totalorder 0, 0
    // Predicated region
    $region26: #{panns_focal_loss.1} parent=1 // pred_check
      %p65 = pneg %p64
    $region27: #{panns_focal_loss.1} parent=1 // pred_check_branch
      %67 = sbr.rel (%p65) target = $region29
    $region28: #{panns_focal_loss.1} parent=1 // pred_region
      %v68 = vlaneseq
      %vm69 = vcmp.ge.s32.totalorder %v68, 0
      %vm70 = vcmp.lt.s32.totalorder %v68, 527
      %vm71 = vmand %vm69, %vm70
      %72 = vst.msk [vmem:[#allocation2] sm:$0x1f] %vm71, 0.0
    $region29: #{panns_focal_loss.1} parent=1 // pred_fallthru
      _
    %v73 = vld [vmem:[#allocation3] sm:$0xff]
    %v74 = vld [vmem:[#allocation3 + $0x8] sm:$0xff]
    %v75 = vld [vmem:[#allocation3 + $0x10] sm:$0xff]
    %v76 = vld [vmem:[#allocation3 + $0x18] sm:$0xff]
    %v77 = vld [vmem:[#allocation3 + $0x20] sm:$0xff]
    %v78 = vld [vmem:[#allocation5] sm:$0xff]
    %v79 = vld [vmem:[#allocation5 + $0x8] sm:$0xff]
    %v80 = vld [vmem:[#allocation5 + $0x10] sm:$0xff]
    %v81 = vld [vmem:[#allocation5 + $0x18] sm:$0xff]
    %v82 = vld [vmem:[#allocation5 + $0x20] sm:$0xff]
    %v83 = vld [vmem:[#allocation7] sm:$0xff]
    %v84 = vld [vmem:[#allocation7 + $0x8] sm:$0xff]
    %v85 = vld [vmem:[#allocation7 + $0x10] sm:$0xff]
    %v86 = vld [vmem:[#allocation7 + $0x18] sm:$0xff]
    %v87 = vld [vmem:[#allocation7 + $0x20] sm:$0xff]
    %v88 = vand.u32 2147483647, %v73
    %v89 = vand.u32 2147483647, %v74
    %v90 = vand.u32 2147483647, %v75
    %v91 = vand.u32 2147483647, %v76
    %v92 = vand.u32 2147483647, %v77
    %vm93 = vcmp.lt.f32.partialorder %v88, inf
    %vm94 = vcmp.lt.f32.partialorder %v89, inf
    %vm95 = vcmp.lt.f32.partialorder %v90, inf
    %vm96 = vcmp.lt.f32.partialorder %v91, inf
    %vm97 = vcmp.lt.f32.partialorder %v92, inf
    %v98 = vsel %vm93, %v73, 0.0
    %v99 = vsel %vm94, %v74, 0.0
    %v100 = vsel %vm95, %v75, 0.0
    %v101 = vsel %vm96, %v76, 0.0
    %v102 = vsel %vm97, %v77, 0.0
    %v103 = vand.u32 2147483647, %v78
    %v104 = vand.u32 2147483647, %v79
    %v105 = vand.u32 2147483647, %v80
    %v106 = vand.u32 2147483647, %v81
    %v107 = vand.u32 2147483647, %v82
    %vm108 = vcmp.lt.f32.partialorder %v103, inf
    %vm109 = vcmp.lt.f32.partialorder %v104, inf
    %vm110 = vcmp.lt.f32.partialorder %v105, inf
    %vm111 = vcmp.lt.f32.partialorder %v106, inf
    %vm112 = vcmp.lt.f32.partialorder %v107, inf
    %v113 = vsel %vm108, %v78, 0.0
    %v114 = vsel %vm109, %v79, 0.0
    %v115 = vsel %vm110, %v80, 0.0
    %v116 = vsel %vm111, %v81, 0.0
    %v117 = vsel %vm112, %v82, 0.0
    %v118 = vand.u32 2147483647, %v98
    %v119 = vand.u32 2147483647, %v99
    %v120 = vand.u32 2147483647, %v100
    %v121 = vand.u32 2147483647, %v101
    %v122 = vand.u32 2147483647, %v102
    %v123 = vsub.f32 0.0, %v118
    %v124 = vsub.f32 0.0, %v119
    %v125 = vsub.f32 0.0, %v120
    %v126 = vsub.f32 0.0, %v121
    %v127 = vsub.f32 0.0, %v122
    %v128 = vmul.f32 %v123, 1.442695
    %v129 = vpow.pop %v128
    %v130 = vmul.f32 %v124, 1.442695
    %v131 = vpow.pop %v130
    %v132 = vmul.f32 %v125, 1.442695
    %v133 = vpow.pop %v132
    %v134 = vmul.f32 %v126, 1.442695
    %v135 = vpow.pop %v134
    %v136 = vmul.f32 %v127, 1.442695
    %v137 = vpow.pop %v136
    %v138 = vmax.f32 %v98, 0.0
    %v139 = vmax.f32 %v99, 0.0
    %v140 = vmax.f32 %v100, 0.0
    %v141 = vmax.f32 %v101, 0.0
    %v142 = vmax.f32 %v102, 0.0
    %v143 = vmul.f32 %v98, %v83
    %v144 = vmul.f32 %v99, %v84
    %v145 = vmul.f32 %v100, %v85
    %v146 = vmul.f32 %v101, %v86
    %v147 = vmul.f32 %v102, %v87
    %v148 = vsub.f32 %v138, %v143
    %v149 = vsub.f32 %v139, %v144
    %v150 = vsub.f32 %v140, %v145
    %v151 = vsub.f32 %v141, %v146
    %v152 = vsub.f32 %v142, %v147
    %v153 = vadd.f32 %v129, 1.0
    %v154 = vlog2.pop %v153
    %v155 = vmul.f32 %v154, 0.6931472
    %v156 = vmul.f32 -0.5, %v129
    %v157 = vadd.f32 %v156, 1.0
    %v158 = vmul.f32 %v157, %v129
    %v159 = vand.u32 2147483647, %v129
    %vm160 = vcmp.lt.f32.partialorder %v159, 0.0004427343
    %v161 = vsel %vm160, %v158, %v155
    %v162 = vadd.f32 %v131, 1.0
    %v163 = vlog2.pop %v162
    %v164 = vmul.f32 %v163, 0.6931472
    %v165 = vmul.f32 -0.5, %v131
    %v166 = vadd.f32 %v165, 1.0
    %v167 = vmul.f32 %v166, %v131
    %v168 = vand.u32 2147483647, %v131
    %vm169 = vcmp.lt.f32.partialorder %v168, 0.0004427343
    %v170 = vsel %vm169, %v167, %v164
    %v171 = vadd.f32 %v133, 1.0
    %v172 = vlog2.pop %v171
    %v173 = vmul.f32 %v172, 0.6931472
    %v174 = vmul.f32 -0.5, %v133
    %v175 = vadd.f32 %v174, 1.0
    %v176 = vmul.f32 %v175, %v133
    %v177 = vand.u32 2147483647, %v133
    %vm178 = vcmp.lt.f32.partialorder %v177, 0.0004427343
    %v179 = vsel %vm178, %v176, %v173
    %v180 = vadd.f32 %v135, 1.0
    %v181 = vlog2.pop %v180
    %v182 = vmul.f32 %v181, 0.6931472
    %v183 = vmul.f32 -0.5, %v135
    %v184 = vadd.f32 %v183, 1.0
    %v185 = vmul.f32 %v184, %v135
    %v186 = vand.u32 2147483647, %v135
    %vm187 = vcmp.lt.f32.partialorder %v186, 0.0004427343
    %v188 = vsel %vm187, %v185, %v182
    %v189 = vadd.f32 %v137, 1.0
    %v190 = vlog2.pop %v189
    %v191 = vmul.f32 %v190, 0.6931472
    %v192 = vmul.f32 -0.5, %v137
    %v193 = vadd.f32 %v192, 1.0
    %v194 = vmul.f32 %v193, %v137
    %v195 = vand.u32 2147483647, %v137
    %vm196 = vcmp.lt.f32.partialorder %v195, 0.0004427343
    %v197 = vsel %vm196, %v194, %v191
    %v198 = vadd.f32 %v148, %v161
    %v199 = vadd.f32 %v149, %v170
    %v200 = vadd.f32 %v150, %v179
    %v201 = vadd.f32 %v151, %v188
    %v202 = vadd.f32 %v152, %v197
    %v203 = vadd.f32 %v129, 1.0
    %v204 = vadd.f32 %v131, 1.0
    %v205 = vadd.f32 %v133, 1.0
    %v206 = vadd.f32 %v135, 1.0
    %v207 = vadd.f32 %v137, 1.0
    %v208 = vrcp.pop %v203
    %v209 = vrcp.pop %v204
    %v210 = vrcp.pop %v205
    %v211 = vrcp.pop %v206
    %v212 = vrcp.pop %v207
    %vm213 = vcmp.ge.f32.partialorder %v98, 0.0
    %vm214 = vcmp.ge.f32.partialorder %v99, 0.0
    %vm215 = vcmp.ge.f32.partialorder %v100, 0.0
    %vm216 = vcmp.ge.f32.partialorder %v101, 0.0
    %vm217 = vcmp.ge.f32.partialorder %v102, 0.0
    %v218 = vmul.f32 %v129, %v208
    %v219 = vmul.f32 %v131, %v209
    %v220 = vmul.f32 %v133, %v210
    %v221 = vmul.f32 %v135, %v211
    %v222 = vmul.f32 %v137, %v212
    %v223 = vsel %vm213, %v208, %v218
    %v224 = vsel %vm214, %v209, %v219
    %v225 = vsel %vm215, %v210, %v220
    %v226 = vsel %vm216, %v211, %v221
    %v227 = vsel %vm217, %v212, %v222
    %vm228 = vcmp.ge.f32.partialorder %v83, 0.5
    %vm229 = vcmp.ge.f32.partialorder %v84, 0.5
    %vm230 = vcmp.ge.f32.partialorder %v85, 0.5
    %vm231 = vcmp.ge.f32.partialorder %v86, 0.5
    %vm232 = vcmp.ge.f32.partialorder %v87, 0.5
    %v233 = vsub.f32 1.0, %v223
    %v234 = vsub.f32 1.0, %v224
    %v235 = vsub.f32 1.0, %v225
    %v236 = vsub.f32 1.0, %v226
    %v237 = vsub.f32 1.0, %v227
    %v238 = vsel %vm228, %v233, %v223
    %v239 = vsel %vm229, %v234, %v224
    %v240 = vsel %vm230, %v235, %v225
    %v241 = vsel %vm231, %v236, %v226
    %v242 = vsel %vm232, %v237, %v227
    %v243 = vmul.f32 %v238, %v238
    %v244 = vmul.f32 %v239, %v239
    %v245 = vmul.f32 %v240, %v240
    %v246 = vmul.f32 %v241, %v241
    %v247 = vmul.f32 %v242, %v242
    %v248 = vmul.f32 %v243, %v198
    %v249 = vmul.f32 %v244, %v199
    %v250 = vmul.f32 %v245, %v200
    %v251 = vmul.f32 %v246, %v201
    %v252 = vmul.f32 %v247, %v202
    %v253 = vlog2.pop %v113
    %v254 = vmul.f32 %v253, 0.6931472
    %v255 = vlog2.pop %v114
    %v256 = vmul.f32 %v255, 0.6931472
    %v257 = vlog2.pop %v115
    %v258 = vmul.f32 %v257, 0.6931472
    %v259 = vlog2.pop %v116
    %v260 = vmul.f32 %v259, 0.6931472
    %v261 = vlog2.pop %v117
    %v262 = vmul.f32 %v261, 0.6931472
    %v263 = vmax.f32 %v254, -100.0
    %v264 = vmax.f32 %v256, -100.0
    %v265 = vmax.f32 %v258, -100.0
    %v266 = vmax.f32 %v260, -100.0
    %v267 = vmax.f32 %v262, -100.0
    %v268 = vsub.f32 1.0, %v113
    %v269 = vsub.f32 1.0, %v114
    %v270 = vsub.f32 1.0, %v115
    %v271 = vsub.f32 1.0, %v116
    %v272 = vsub.f32 1.0, %v117
    %v273 = vlog2.pop %v268
    %v274 = vmul.f32 %v273, 0.6931472
    %v275 = vlog2.pop %v269
    %v276 = vmul.f32 %v275, 0.6931472
    %v277 = vlog2.pop %v270
    %v278 = vmul.f32 %v277, 0.6931472
    %v279 = vlog2.pop %v271
    %v280 = vmul.f32 %v279, 0.6931472
    %v281 = vlog2.pop %v272
    %v282 = vmul.f32 %v281, 0.6931472
    %v283 = vmax.f32 %v274, -100.0
    %v284 = vmax.f32 %v276, -100.0
    %v285 = vmax.f32 %v278, -100.0
    %v286 = vmax.f32 %v280, -100.0
    %v287 = vmax.f32 %v282, -100.0
    %v288 = vmul.f32 %v83, %v263
    %v289 = vmul.f32 %v84, %v264
    %v290 = vmul.f32 %v85, %v265
    %v291 = vmul.f32 %v86, %v266
    %v292 = vmul.f32 %v87, %v267
    %v293 = vsub.f32 1.0, %v83
    %v294 = vsub.f32 1.0, %v84
    %v295 = vsub.f32 1.0, %v85
    %v296 = vsub.f32 1.0, %v86
    %v297 = vsub.f32 1.0, %v87
    %v298 = vmul.f32 %v293, %v283
    %v299 = vmul.f32 %v294, %v284
    %v300 = vmul.f32 %v295, %v285
    %v301 = vmul.f32 %v296, %v286
    %v302 = vmul.f32 %v297, %v287
    %v303 = vadd.f32 %v288, %v298
    %v304 = vadd.f32 %v289, %v299
    %v305 = vadd.f32 %v290, %v300
    %v306 = vadd.f32 %v291, %v301
    %v307 = vadd.f32 %v292, %v302
    %v308 = vsub.f32 0.0, %v303
    %v309 = vsub.f32 0.0, %v304
    %v310 = vsub.f32 0.0, %v305
    %v311 = vsub.f32 0.0, %v306
    %v312 = vsub.f32 0.0, %v307
    %v313 = vadd.f32 %v248, %v308
    %v314 = vadd.f32 %v249, %v309
    %v315 = vadd.f32 %v250, %v310
    %v316 = vadd.f32 %v251, %v311
    %v317 = vadd.f32 %v252, %v312
    %v318 = vld [vmem:[#allocation2] sm:$0x1f]
    %v319 = vrot.slane %v313, 4
    %v320 = vadd.f32 %v313, %v319
    %v321 = vrot.slane %v320, 2
    %v322 = vadd.f32 %v320, %v321
    %v323 = vrot.slane %v322, 1
    %v324 = vadd.f32 %v322, %v323
    %v325 = vrot.slane %v314, 4
    %v326 = vadd.f32 %v314, %v325
    %v327 = vrot.slane %v326, 2
    %v328 = vadd.f32 %v326, %v327
    %v329 = vrot.slane %v328, 1
    %v330 = vadd.f32 %v328, %v329
    %v331 = vrot.slane %v315, 4
    %v332 = vadd.f32 %v315, %v331
    %v333 = vrot.slane %v332, 2
    %v334 = vadd.f32 %v332, %v333
    %v335 = vrot.slane %v334, 1
    %v336 = vadd.f32 %v334, %v335
    %v337 = vrot.slane %v316, 4
    %v338 = vadd.f32 %v316, %v337
    %v339 = vrot.slane %v338, 2
    %v340 = vadd.f32 %v338, %v339
    %v341 = vrot.slane %v340, 1
    %v342 = vadd.f32 %v340, %v341
    %vm343 = vcmask 121856
    %v344 = vsel %vm343, %v317, 0.0
    %v345 = vrot.slane %v344, 4
    %v346 = vadd.f32 %v344, %v345
    %v347 = vrot.slane %v346, 2
    %v348 = vadd.f32 %v346, %v347
    %v349 = vrot.slane %v348, 1
    %v350 = vadd.f32 %v348, %v349
    %v356 = vcombine.low %v324, %v330
    %v357 = vcombine.low %v336, %v342
    %v359 = vunpack.c.l.s4 1966171168
    %v360 = vunpack.c.0.s8 %v359
    %v361 = vlaneseq
    %v362 = vshrl.u32 %v361, 7
    %v363 = vsub.s32 %v360, %v362
    %v364 = vrot.slane %v356, %v363
    %v366 = vunpack.c.l.s4 1966171168
    %v367 = vunpack.c.0.s8 %v366
    %v368 = vlaneseq
    %v369 = vshrl.u32 %v368, 7
    %v370 = vsub.s32 %v367, %v369
    %v371 = vrot.slane %v357, %v370
    %v373 = vunpack.c.l.s4 1966171168
    %v374 = vunpack.c.0.s8 %v373
    %v375 = vlaneseq
    %v376 = vshrl.u32 %v375, 7
    %v377 = vsub.s32 %v374, %v376
    %v378 = vrot.slane %v350, %v377
    %v379 = vcombine.low %v364, %v371
    %v381 = vunpack.c.l.s4 1966171168
    %v382 = vunpack.c.0.s8 %v381
    %v383 = vlaneseq
    %v384 = vshrl.u32 %v383, 7
    %v385 = vsub.s32 %v382, %v384
    %v386 = vrot.slane %v379, %v385
    %v388 = vunpack.c.l.s4 1966171168
    %v389 = vunpack.c.0.s8 %v388
    %v390 = vlaneseq
    %v391 = vshrl.u32 %v390, 7
    %v392 = vsub.s32 %v389, %v391
    %v393 = vrot.slane %v378, %v392
    %v394 = vcombine.low %v386, %v393
    %v396 = vadd.f32 %v318, %v394
    %v397 = vlaneseq
    %vm398 = vcmp.ge.s32.totalorder %v397, 0
    %vm399 = vcmp.lt.s32.totalorder %v397, 527
    %vm400 = vmand %vm398, %vm399
    %401 = vst.msk [vmem:[#allocation2] sm:$0x1f] %vm400, %v396
    // Predicated region
    $region30: #{panns_focal_loss.1} parent=1 // pred_check
      %p402 = pneg %p64
    $region31: #{panns_focal_loss.1} parent=1 // pred_check_branch
      %404 = sbr.rel (%p402) target = $region33
    $region32: #{panns_focal_loss.1} parent=1 // pred_region
      %v405 = vld [vmem:[#allocation2] sm:$0x1f]
      %406 = vst.msk [vmem:[%s3] sm:$0x1f] %vm400, %v405
    $region33: #{panns_focal_loss.1} parent=1 // pred_fallthru
      _
    // Predicated region
    $region34: #{panns_focal_loss.1} parent=1 // pred_check
      _
    $region35: #{panns_focal_loss.1} parent=1 // pred_check_branch
      %408 = sbr.rel (0) target = $region37
    $region36: #{panns_focal_loss.1} parent=1 // pred_region
      _
    $region37: #{panns_focal_loss.1} parent=1 // pred_fallthru
      _
    // Predicated region
    $region38: #{panns_focal_loss.1} parent=1 // pred_check
      _
    $region39: #{panns_focal_loss.1} parent=1 // pred_check_branch
      %410 = sbr.rel (0) target = $region41
    $region40: #{panns_focal_loss.1} parent=1 // pred_region
      _
    $region41: #{panns_focal_loss.1} parent=1 // pred_fallthru
      _
    %411 = vsyncpa [#allocation4], 1
    %412 = vsyncpa [#allocation6], 1

</llo_original>
